<compile_context>
chip_gen: v6e
topology: v6e:2x2x1
jax: 0.10.0
libtpu: 0.0.40
codegen_flags: <defaults>
</compile_context>

<pallas_src>
import functools
import math

import jax
import jax.numpy as jnp
from jax import lax
from jax.experimental import pallas as pl
from jax.experimental.pallas import tpu as pltpu


def _round_up(x: int, m: int) -> int:
    return ((x + m - 1) // m) * m


def _token_embedding_gather_kernel(tok_ref, table_ref, out_ref, buf_ref, sem_ref,
                                   *, scale, bt):
    # tok_ref:   SMEM (n_pad,) int32   - all token ids (scalar prefetch)
    # table_ref: HBM  (V, Ep)          - embedding table (never auto-copied)
    # out_ref:   VMEM (bt, Ep)         - scaled embeddings for this token block
    # buf_ref:   VMEM (2, bt, Ep)      - double-buffered gather destination
    # sem_ref:   DMA semaphores (2,)
    i = pl.program_id(0)
    nb = pl.num_programs(0)
    slot = lax.rem(i, 2)

    def issue_block(block_idx, s):
        # Issue bt row copies HBM -> VMEM for token block `block_idx` into slot s.
        def body(t, carry):
            row = tok_ref[block_idx * bt + t]
            pltpu.make_async_copy(
                table_ref.at[pl.ds(row, 1), :],
                buf_ref.at[s, pl.ds(t, 1), :],
                sem_ref.at[s],
            ).start()
            return carry
        lax.fori_loop(0, bt, body, 0)

    def wait_block(s):
        # Wait for the bt row copies previously issued into slot s.
        def body(t, carry):
            pltpu.make_async_copy(
                table_ref.at[pl.ds(0, 1), :],
                buf_ref.at[s, pl.ds(0, 1), :],
                sem_ref.at[s],
            ).wait()
            return carry
        lax.fori_loop(0, bt, body, 0)

    # Prologue: first block has nothing prefetched yet.
    @pl.when(i == 0)
    def _prologue():
        issue_block(0, 0)

    # Prefetch next token block into the other slot (overlaps with this
    # block's waits, scale+store, and the pipelined output writeback).
    @pl.when(i + 1 < nb)
    def _prefetch_next():
        issue_block(i + 1, 1 - slot)

    wait_block(slot)
    out_ref[...] = (buf_ref[slot] * scale).astype(out_ref.dtype)


def token_embedding(tokens: jax.Array, emb_table: jax.Array, *,
                    block_tokens: int = 256) -> jax.Array:
    """Pallas equivalent of TokenEmbedding.forward (DMA row-gather)."""
    vocab_size, emb_size = emb_table.shape
    out_dtype = emb_table.dtype
    itemsize = jnp.dtype(out_dtype).itemsize
    scale = math.sqrt(float(emb_size))

    orig_shape = tokens.shape
    flat = tokens.reshape(-1).astype(jnp.int32)            # tokens.long() analogue
    # Clamp so padded / out-of-range ids can never make a row DMA go OOB.
    flat = jnp.clip(flat, 0, vocab_size - 1)
    n = flat.shape[0]

    # Lane-dense rows: pad embedding width to a multiple of 128.
    e_pad = _round_up(emb_size, 128)

    # Token block size: multiple of 8, capped so (double-buffered gather
    # scratch + double-buffered output block) stays within a ~24 MiB budget
    # even on v7x's 64 MiB VMEM.
    vmem_budget = 24 * 1024 * 1024
    bt_cap = max(8, (vmem_budget // (4 * e_pad * itemsize)) // 8 * 8)
    bt = min(block_tokens, bt_cap)
    bt = _round_up(min(bt, _round_up(max(n, 1), 8)), 8)

    n_pad = _round_up(max(n, 1), bt)
    if n_pad != n:
        flat = jnp.pad(flat, (0, n_pad - n))               # padded ids -> row 0

    table = emb_table
    if e_pad != emb_size:
        table = jnp.pad(table, ((0, 0), (0, e_pad - emb_size)))

    kernel = functools.partial(_token_embedding_gather_kernel, scale=scale, bt=bt)

    # VMEM actually used: (2,bt,e_pad) scratch + double-buffered (bt,e_pad) out.
    need = 4 * bt * e_pad * itemsize
    vmem_limit = int(min(max(2 * need, 16 * 1024 * 1024), 48 * 1024 * 1024))

    out = pl.pallas_call(
        kernel,
        out_shape=jax.ShapeDtypeStruct((n_pad, e_pad), out_dtype),
        grid_spec=pltpu.PrefetchScalarGridSpec(
            num_scalar_prefetch=1,                         # token ids -> SMEM
            grid=(n_pad // bt,),
            in_specs=[
                # Embedding table stays in HBM; rows are gathered manually.
                pl.BlockSpec(memory_space=pl.ANY),
            ],
            out_specs=pl.BlockSpec((bt, e_pad), lambda i, tok: (i, 0)),
            scratch_shapes=[
                pltpu.VMEM((2, bt, e_pad), out_dtype),
                pltpu.SemaphoreType.DMA((2,)),
            ],
        ),
        compiler_params=pltpu.CompilerParams(
            # "arbitrary": scratch/semaphore state is carried across grid
            # steps (cross-step prefetch), so the axis must run sequentially.
            dimension_semantics=("arbitrary",),
            vmem_limit_bytes=vmem_limit,
        ),
    )(flat, table)

    out = out[:n, :emb_size]
    return out.reshape(*orig_shape, emb_size)


if __name__ == "__main__":
    key = jax.random.PRNGKey(0)
    k_tok, k_emb, k_tok2, k_emb2 = jax.random.split(key, 4)

    # --- Case 1: module-scale toy shapes (single token block, prologue path) ---
    vocab_size, emb_size = 64, 32
    batch, seq = 2, 8
    emb_table = jax.random.normal(k_emb, (vocab_size, emb_size), dtype=jnp.float32)
    tokens = jax.random.randint(k_tok, (batch, seq), 0, vocab_size, dtype=jnp.int32)

    out = token_embedding(tokens, emb_table)
    out = jax.block_until_ready(out)

    ref = emb_table[tokens] * math.sqrt(emb_size)
    assert out.shape == (batch, seq, emb_size)
    assert jnp.allclose(out, ref, atol=1e-5, rtol=1e-5)

    # --- Case 2: multi-block token axis (prefetch path) + padded widths ---
    vocab2, emb2 = 1000, 96
    batch2, seq2 = 3, 100
    emb_table2 = jax.random.normal(k_emb2, (vocab2, emb2), dtype=jnp.float32)
    tokens2 = jax.random.randint(k_tok2, (batch2, seq2), 0, vocab2, dtype=jnp.int32)

    out2 = token_embedding(tokens2, emb_table2, block_tokens=128)
    out2 = jax.block_until_ready(out2)

    ref2 = emb_table2[tokens2] * math.sqrt(emb2)
    assert out2.shape == (batch2, seq2, emb2)
    assert jnp.allclose(out2, ref2, atol=1e-5, rtol=1e-5)

    print("KERNEL_OK")
</pallas_src>

<mosaic_0001>
module attributes {stable_mosaic.version = 11 : i64} {
  func.func @_token_embedding_gather_kernel(%arg0: i32, %arg1: memref<16xi32, #tpu.memory_space<smem>>, %arg2: memref<64x128xf32, #tpu.memory_space<any>>, %arg3: memref<16x128xf32, #tpu.memory_space<vmem>>, %arg4: memref<2x16x128xf32, #tpu.memory_space<vmem>>, %arg5: memref<2x!tpu.dma_semaphore, #tpu.memory_space<semaphore_mem>>) attributes {dimension_semantics = [#tpu.dimension_semantics<arbitrary>], iteration_bounds = array<i64: 1>, scalar_prefetch = 1 : i64, scratch_operands = 2 : i64, tpu.core_type = #tpu.core_type<tc>, window_params = [{}, {transform_indices = @transform_1, window_bounds = array<i64: 16, 128>}]} {
    %c2_i32 = arith.constant 2 : i32
    %0 = arith.remsi %arg0, %c2_i32 : i32
    %c0_i32 = arith.constant 0 : i32
    %1 = arith.cmpi eq, %arg0, %c0_i32 : i32
    %2 = arith.extui %1 : i1 to i32
    %c0_i32_0 = arith.constant 0 : i32
    %3 = arith.cmpi ne, %2, %c0_i32_0 : i32
    scf.if %3 {
      %c0_i32_8 = arith.constant 0 : i32
      %c16_i32_9 = arith.constant 16 : i32
      %15 = arith.addi %c0_i32_8, %c16_i32_9 : i32
      %c1_i32_10 = arith.constant 1 : i32
      scf.for %arg6 = %c0_i32_8 to %15 step %c1_i32_10  : i32 {
        %c0_i32_12 = arith.constant 0 : i32
        %16 = arith.addi %c0_i32_12, %arg6 : i32
        %17 = arith.index_cast %16 : i32 to index
        %18 = memref.load %arg1[%17] : memref<16xi32, #tpu.memory_space<smem>>
        %c0_i32_13 = arith.constant 0 : i32
        %c0_i32_14 = arith.constant 0 : i32
        %c0_i32_15 = arith.constant 0 : i32
        %19 = tpu.memref_slice %arg2[%18, %c0_i32_15] : memref<64x128xf32, #tpu.memory_space<any>> -> memref<1x128xf32, #tpu.memory_space<any>>
        %c0_i32_16 = arith.constant 0 : i32
        %20 = tpu.memref_slice %arg4[%c0_i32_13, %arg6, %c0_i32_16] : memref<2x16x128xf32, #tpu.memory_space<vmem>> -> memref<1x1x128xf32, #tpu.memory_space<vmem>>
        %21 = tpu.memref_squeeze %20 : memref<1x1x128xf32, #tpu.memory_space<vmem>> -> memref<1x128xf32, #tpu.memory_space<vmem>>
        %22 = tpu.memref_slice %arg5[%c0_i32_14] : memref<2x!tpu.dma_semaphore, #tpu.memory_space<semaphore_mem>> -> memref<1x!tpu.dma_semaphore, #tpu.memory_space<semaphore_mem>>
        %23 = tpu.memref_squeeze %22 : memref<1x!tpu.dma_semaphore, #tpu.memory_space<semaphore_mem>> -> memref<!tpu.dma_semaphore, #tpu.memory_space<semaphore_mem>>
        tpu.enqueue_dma source(%19 : memref<1x128xf32, #tpu.memory_space<any>>) target(%21 : memref<1x128xf32, #tpu.memory_space<vmem>>) target_semaphore(%23 : memref<!tpu.dma_semaphore, #tpu.memory_space<semaphore_mem>>)
      }
      %c16_i32_11 = arith.constant 16 : i32
    } else {
    }
    %c1_i32 = arith.constant 1 : i32
    %4 = arith.addi %arg0, %c1_i32 : i32
    %c1_i32_1 = arith.constant 1 : i32
    %5 = arith.cmpi slt, %4, %c1_i32_1 : i32
    %6 = arith.extui %5 : i1 to i32
    %c0_i32_2 = arith.constant 0 : i32
    %7 = arith.cmpi ne, %6, %c0_i32_2 : i32
    scf.if %7 {
      %c1_i32_8 = arith.constant 1 : i32
      %15 = arith.addi %arg0, %c1_i32_8 : i32
      %c1_i32_9 = arith.constant 1 : i32
      %16 = arith.subi %c1_i32_9, %0 : i32
      %c0_i32_10 = arith.constant 0 : i32
      %c16_i32_11 = arith.constant 16 : i32
      %17 = arith.addi %c0_i32_10, %c16_i32_11 : i32
      %c1_i32_12 = arith.constant 1 : i32
      scf.for %arg6 = %c0_i32_10 to %17 step %c1_i32_12  : i32 {
        %c16_i32_14 = arith.constant 16 : i32
        %18 = arith.muli %15, %c16_i32_14 : i32
        %19 = arith.addi %18, %arg6 : i32
        %20 = arith.index_cast %19 : i32 to index
        %21 = memref.load %arg1[%20] : memref<16xi32, #tpu.memory_space<smem>>
        %c0_i32_15 = arith.constant 0 : i32
        %22 = tpu.memref_slice %arg2[%21, %c0_i32_15] : memref<64x128xf32, #tpu.memory_space<any>> -> memref<1x128xf32, #tpu.memory_space<any>>
        %c0_i32_16 = arith.constant 0 : i32
        %23 = tpu.memref_slice %arg4[%16, %arg6, %c0_i32_16] : memref<2x16x128xf32, #tpu.memory_space<vmem>> -> memref<1x1x128xf32, #tpu.memory_space<vmem>>
        %24 = tpu.memref_squeeze %23 : memref<1x1x128xf32, #tpu.memory_space<vmem>> -> memref<1x128xf32, #tpu.memory_space<vmem>>
        %25 = tpu.memref_slice %arg5[%16] : memref<2x!tpu.dma_semaphore, #tpu.memory_space<semaphore_mem>> -> memref<1x!tpu.dma_semaphore, #tpu.memory_space<semaphore_mem>>
        %26 = tpu.memref_squeeze %25 : memref<1x!tpu.dma_semaphore, #tpu.memory_space<semaphore_mem>> -> memref<!tpu.dma_semaphore, #tpu.memory_space<semaphore_mem>>
        tpu.enqueue_dma source(%22 : memref<1x128xf32, #tpu.memory_space<any>>) target(%24 : memref<1x128xf32, #tpu.memory_space<vmem>>) target_semaphore(%26 : memref<!tpu.dma_semaphore, #tpu.memory_space<semaphore_mem>>)
      }
      %c16_i32_13 = arith.constant 16 : i32
    } else {
    }
    %c0_i32_3 = arith.constant 0 : i32
    %c16_i32 = arith.constant 16 : i32
    %8 = arith.addi %c0_i32_3, %c16_i32 : i32
    %c1_i32_4 = arith.constant 1 : i32
    scf.for %arg6 = %c0_i32_3 to %8 step %c1_i32_4  : i32 {
      %c0_i32_8 = arith.constant 0 : i32
      %c0_i32_9 = arith.constant 0 : i32
      %15 = tpu.memref_slice %arg2[%c0_i32_8, %c0_i32_9] : memref<64x128xf32, #tpu.memory_space<any>> -> memref<1x128xf32, #tpu.memory_space<any>>
      %c0_i32_10 = arith.constant 0 : i32
      %c0_i32_11 = arith.constant 0 : i32
      %16 = tpu.memref_slice %arg4[%0, %c0_i32_10, %c0_i32_11] : memref<2x16x128xf32, #tpu.memory_space<vmem>> -> memref<1x1x128xf32, #tpu.memory_space<vmem>>
      %17 = tpu.memref_squeeze %16 : memref<1x1x128xf32, #tpu.memory_space<vmem>> -> memref<1x128xf32, #tpu.memory_space<vmem>>
      %18 = tpu.memref_slice %arg5[%0] : memref<2x!tpu.dma_semaphore, #tpu.memory_space<semaphore_mem>> -> memref<1x!tpu.dma_semaphore, #tpu.memory_space<semaphore_mem>>
      %19 = tpu.memref_squeeze %18 : memref<1x!tpu.dma_semaphore, #tpu.memory_space<semaphore_mem>> -> memref<!tpu.dma_semaphore, #tpu.memory_space<semaphore_mem>>
      tpu.wait_dma2 semaphore(%19 : memref<!tpu.dma_semaphore, #tpu.memory_space<semaphore_mem>>) src(%15 : memref<1x128xf32, #tpu.memory_space<any>>) dst(%17 : memref<1x128xf32, #tpu.memory_space<vmem>>)
    }
    %9 = arith.index_cast %0 : i32 to index
    %c0 = arith.constant 0 : index
    %c0_5 = arith.constant 0 : index
    %10 = vector.load %arg4[%9, %c0, %c0_5] : memref<2x16x128xf32, #tpu.memory_space<vmem>>, vector<1x16x128xf32>
    %11 = vector.shape_cast %10 : vector<1x16x128xf32> to vector<16x128xf32>
    %cst = arith.constant 5.65685415 : f32
    %12 = vector.broadcast %cst : f32 to vector<16x128xf32>
    %13 = arith.mulf %11, %12 : vector<16x128xf32>
    %c0_6 = arith.constant 0 : index
    %c0_7 = arith.constant 0 : index
    %14 = vector.load %arg3[%c0_6, %c0_7] : memref<16x128xf32, #tpu.memory_space<vmem>>, vector<16x128xf32>
    tpu.vector_store %arg3[%c0_6, %c0_7], %13 {strides = array<i32>} : memref<16x128xf32, #tpu.memory_space<vmem>>, vector<16x128xf32>,
    return
  }
  func.func @transform_1(%arg0: i32, %arg1: memref<16xi32, #tpu.memory_space<smem>>) -> (i32, i32) {
    %c0_i32 = arith.constant 0 : i32
    %c0_i32_0 = arith.constant 0 : i32
    return %arg0, %c0_i32 : i32, i32
  }
}

</mosaic_0001>

<llo_original>
// kernel: tpu_custom_call.1
$region0: #{tpu_custom_call.1}
  #allocation0 [shape = 'u32[]', space=smem, size = 0x4, offset = 0x4, fixed_abs, tag = 'smem constant byte address 0x4 - core index']
  #allocation1 [shape = 'u32[144,128]{1,0:T(1,128)}', space=vmem, size = 0x12000, scoped, tag = 'internal scratch']
  #allocation2 [shape = 'f32[2,16,128]{2,1,0:T(8,128)}', space=vmem, size = 0x4000, scoped, tag = 'scratch operand']
  #allocation3 [shape = 's32[2]{0}', space=sflag, size = 0x8, scoped, tag = 'scratch operand']
  #allocation4 [shape = 's32[1]{0}', space=sflag, size = 0x4, scoped, tag = 'scoped memory for tpu_custom_call.1']
  #allocation5 [shape = 'u8[512]{0}', space=smem, size = 0x200, scoped, tag = 'prefetched SMEM operand 0']
  #allocation8 [shape = 's32[]', space=sflag, size = 0x4, offset = 0, fixed_abs, tag = 'sflag constant byte address 0x0 - dummy sync flag']
  #allocation9 [shape = 's32[]', space=sflag, size = 0x4, offset = 0, fixed_abs, tag = 'sflag constant byte address 0x0 - dummy sync flag']
  #allocation10 [shape = 'u32[]', space=smem, size = 0x4, offset = 0x44, fixed_abs, tag = 'smem constant byte address 0x44 - assertion arg 0']
  #allocation11 [shape = 'u32[]', space=smem, size = 0x4, offset = 0x48, fixed_abs, tag = 'smem constant byte address 0x48 - assertion arg 1']
  #allocation12 [shape = 's32[]', space=sflag, size = 0x4, offset = 0, fixed_abs, tag = 'sflag constant byte address 0x0 - dummy sync flag']
  #allocation13 [shape = 's32[]', space=sflag, size = 0x4, offset = 0, fixed_abs, tag = 'sflag constant byte address 0x0 - dummy sync flag']
  %s0 = inlined_call_operand.hbm [shape: s32[16], index: 0, kind: input, shape index: {}]
  %s1 = inlined_call_operand.hbm [shape: f32[64,128], index: 1, kind: input, shape index: {}]
  %s2 = inlined_call_operand.hbm [shape: f32[16,128], index: 2, kind: output, shape index: {}]
  %s3 = sld [smem:[#allocation0]]
  $region47: #{tpu_custom_call.1} parent=0
    _
  %s5 = ssub.s32 1, %s3
  %s6 = scalar_select 0, %s5, %s3
  %8 = dma.hbm_to_smem %s0, 16, [#allocation5], [#allocation4]
  %9 = dma.done [#allocation4], 16
  %10 = sfence
  $region1: #{tpu_custom_call.1} parent=0
    #allocation6 [shape = 'u8[8192]{0}', space=vmem, size = 0x2000, scoped, tag = 'output window, operand 0, single buffered']
    #allocation7 [shape = 's32[1]{0}', space=sflag, size = 0x4, scoped, tag = 'scoped memory for tpu_custom_call.1']
    %11 = vsyncpa [#allocation7], 0
    %s12 = ssub.s32 0, 0
    %s13 = ssub.s32 0, 0
    %p14 = scmp.eq.s32.totalorder 0, 0
    // Predicated region
    $region2: #{tpu_custom_call.1} parent=1 // pred_check
      %p15 = pneg %p14
    $region3: #{tpu_custom_call.1} parent=1 // pred_check_branch
      %17 = sbr.rel (%p15) target = $region5
    $region4: #{tpu_custom_call.1} parent=1 // pred_region
      loop: start=0, step=1, limit=16
      $region6: #{tpu_custom_call.1} parent=4 // loop_pre_header
        _
      $region7: #{tpu_custom_call.1} parent=4 // loop_header
        %s19 = sphi 0, %s23
        %p20 = scmp.ge.s32.totalorder %s19, 16
      $region8: #{tpu_custom_call.1} parent=4 // loop_header_branch
        %22 = sbr.rel (%p20) target = $region12
      $region9: #{tpu_custom_call.1} parent=4 // loop_body
        %s24 = sld [smem:[#allocation5 + %s19]]
        %s25 = smul.addr %s24, 16
        %s26 = scalar_lea.hbm %s1, %s25
        %s27 = scalar_lea.vmem [#allocation2], %s19
        // Predicated region
        $region13: #{tpu_custom_call.1} parent=9 // pred_check
          _
        $region14: #{tpu_custom_call.1} parent=9 // pred_check_branch
          %29 = sbr.rel target = $region16
        $region15: #{tpu_custom_call.1} parent=9 // pred_region
          %30 = sst [smem:[#allocation10]] [#allocation9]
          %31 = sst [smem:[#allocation11]] [#allocation8]
        $region16: #{tpu_custom_call.1} parent=9 // pred_fallthru
          _
        %33 = shalt.err (0)
        %s35 = sshll.u32 %s27, 4
        %s36 = int_to_ptr.vmem [resolvable:$true] %s35
        %38 = dma.hbm_to_vmem [thread:$0]  %s26, 16, %s36, [#allocation3]
      $region10: #{tpu_custom_call.1} parent=4 // loop_footer
        %s23 = sadd.s32 1, %s19
      $region11: #{tpu_custom_call.1} parent=4 // loop_footer_branch
        %18 = sbr.rel target = $region7
      $region12: #{tpu_custom_call.1} parent=4 // loop_exit
        _
    $region5: #{tpu_custom_call.1} parent=1 // pred_fallthru
      _
    %s39 = sadd.s32 0, 1
    %p40 = scmp.lt.s32.totalorder %s39, 1
    // Predicated region
    $region17: #{tpu_custom_call.1} parent=1 // pred_check
      %p41 = pneg %p40
    $region18: #{tpu_custom_call.1} parent=1 // pred_check_branch
      %43 = sbr.rel (%p41) target = $region20
    $region19: #{tpu_custom_call.1} parent=1 // pred_region
      %s44 = ssub.s32 1, 0
      loop: start=0, step=1, limit=16
      $region21: #{tpu_custom_call.1} parent=19 // loop_pre_header
        _
      $region22: #{tpu_custom_call.1} parent=19 // loop_header
        %s46 = sphi 0, %s50
        %p47 = scmp.ge.s32.totalorder %s46, 16
      $region23: #{tpu_custom_call.1} parent=19 // loop_header_branch
        %49 = sbr.rel (%p47) target = $region27
      $region24: #{tpu_custom_call.1} parent=19 // loop_body
        %s51 = smul.u32 %s39, 16
        %s52 = sadd.s32 %s51, %s46
        %s53 = sld [smem:[#allocation5 + %s52]]
        %s54 = smul.addr %s53, 16
        %s55 = scalar_lea.hbm %s1, %s54
        %s56 = smul.u32 %s44, 16
        %s57 = sadd.s32 %s46, %s56
        %s58 = scalar_lea.vmem [#allocation2], %s57
        %s59 = scalar_lea.sflag [#allocation3], %s44
        // Predicated region
        $region28: #{tpu_custom_call.1} parent=24 // pred_check
          _
        $region29: #{tpu_custom_call.1} parent=24 // pred_check_branch
          %61 = sbr.rel target = $region31
        $region30: #{tpu_custom_call.1} parent=24 // pred_region
          %62 = sst [smem:[#allocation10]] [#allocation13]
          %63 = sst [smem:[#allocation11]] [#allocation12]
        $region31: #{tpu_custom_call.1} parent=24 // pred_fallthru
          _
        %65 = shalt.err (0)
        %s67 = sshll.u32 %s58, 4
        %s68 = int_to_ptr.vmem [resolvable:$true] %s67
        %70 = dma.hbm_to_vmem [thread:$0]  %s55, 16, %s68, %s59
      $region25: #{tpu_custom_call.1} parent=19 // loop_footer
        %s50 = sadd.s32 1, %s46
      $region26: #{tpu_custom_call.1} parent=19 // loop_footer_branch
        %45 = sbr.rel target = $region22
      $region27: #{tpu_custom_call.1} parent=19 // loop_exit
        _
    $region20: #{tpu_custom_call.1} parent=1 // pred_fallthru
      _
    loop: start=0, step=1, limit=16
    $region32: #{tpu_custom_call.1} parent=1 // loop_pre_header
      _
    $region33: #{tpu_custom_call.1} parent=1 // loop_header
      %s72 = sphi 0, %s76
      %p73 = scmp.ge.s32.totalorder %s72, 16
    $region34: #{tpu_custom_call.1} parent=1 // loop_header_branch
      %75 = sbr.rel (%p73) target = $region38
    $region35: #{tpu_custom_call.1} parent=1 // loop_body
      %s77 = smul.u32 1, 1
      %s78 = sshll.u32 %s77, 4
      %79 = dma.done [#allocation3], %s78
    $region36: #{tpu_custom_call.1} parent=1 // loop_footer
      %s76 = sadd.s32 1, %s72
    $region37: #{tpu_custom_call.1} parent=1 // loop_footer_branch
      %71 = sbr.rel target = $region33
    $region38: #{tpu_custom_call.1} parent=1 // loop_exit
      _
    %s80 = smul.u32 0, 16
    %s81 = scalar_lea.vmem [#allocation2], %s80
    %v82 = vld [vmem:[%s81] sm:$0xff]
    %v83 = vld [vmem:[%s81 + $0x8] sm:$0xff]
    %v84 = vmul.f32 %v82, 5.656854
    %v85 = vmul.f32 %v83, 5.656854
    %86 = vst [vmem:[#allocation6] sm:$0xff] %v84
    %87 = vst [vmem:[#allocation6 + $0x8] sm:$0xff] %v85
    // Predicated region
    $region39: #{tpu_custom_call.1} parent=1 // pred_check
      _
    $region40: #{tpu_custom_call.1} parent=1 // pred_check_branch
      %89 = sbr.rel (0) target = $region42
    $region41: #{tpu_custom_call.1} parent=1 // pred_region
      %s91 = ssub.s32 256, 256
      %92 = vsyncadd [#allocation7], %s91
      %s93 = sshll.u32 [#allocation6], 4
      %s94 = int_to_ptr.vmem [resolvable:$true] %s93
      %99 = dma.vmem_to_hbm [thread:$0]  %s94, 256, %s2, [#allocation7], 128, 128, 8
    $region42: #{tpu_custom_call.1} parent=1 // pred_fallthru
      _
    // Predicated region
    $region43: #{tpu_custom_call.1} parent=1 // pred_check
      _
    $region44: #{tpu_custom_call.1} parent=1 // pred_check_branch
      %101 = sbr.rel (0) target = $region46
    $region45: #{tpu_custom_call.1} parent=1 // pred_region
      %102 = dma.done [#allocation7], 256
    $region46: #{tpu_custom_call.1} parent=1 // pred_fallthru
      _
    %103 = vsyncpa [#allocation7], 1
  %104 = vsyncmov [#allocation3]
  %s105 = vpop.sfrf %104
  %p106 = scmp.eq.s32.totalorder %s105, 0
  %p107 = pneg %p106
  %109 = shalt.err (%p107)
  %s110 = scalar_lea.sflag [#allocation3], 1
  %111 = vsyncmov %s110
  %s112 = vpop.sfrf %111
  %p113 = scmp.eq.s32.totalorder %s112, 0
  %p114 = pneg %p113
  %116 = shalt.err (%p114)

</llo_original>
